<compile_context>
chip_gen: v6e
topology: v6e:2x2x1
jax: 0.10.0
libtpu: 0.0.40
codegen_flags: <defaults>
</compile_context>

<pallas_src>
import math

import jax
import jax.numpy as jnp
from jax import lax
from jax.experimental import pallas as pl
from jax.experimental.pallas import tpu as pltpu


def sae_kernel(x_ref, w_ref, b_enc_ref, b_dec_ref, x_recon_ref, h_ref, acc_ref):
    """One (batch-tile i, hidden-tile k) grid step."""
    k = pl.program_id(1)

    @pl.when(k == 0)
    def _():
        acc_ref[...] = jnp.zeros_like(acc_ref)

    x = x_ref[...]          # (tb, D)
    w = w_ref[...]          # (th, D)

    # encode: contract over D directly (no transpose of W), accumulate in f32.
    pre = lax.dot_general(
        x, w,
        dimension_numbers=(((1,), (1,)), ((), ())),
        preferred_element_type=jnp.float32,
    ) + b_enc_ref[...]                                  # (tb, th)
    h = jnp.maximum(pre, 0.0)

    # decode partial product on the same (tied) weight tile; f32 accumulator.
    acc_ref[...] += jnp.dot(h.astype(w.dtype), w,
                            preferred_element_type=jnp.float32)

    h_ref[...] = h.astype(h_ref.dtype)

    @pl.when(k == pl.num_programs(1) - 1)
    def _():
        x_recon_ref[...] = (acc_ref[...] + b_dec_ref[...]).astype(x_recon_ref.dtype)


def _pick_tile(n, cap, quantum):
    """Largest multiple of `quantum` <= cap that divides n (else full n)."""
    if n <= cap:
        return n
    t = (cap // quantum) * quantum
    while t >= quantum:
        if n % t == 0:
            return t
        t -= quantum
    return n


def simple_sae_forward(x, w_enc, b_enc, b_dec, *, tb=None, th=None):
    """Runs the SimpleSAE forward pass. Returns (x_recon, h)."""
    B, D = x.shape
    H, D2 = w_enc.shape
    assert D == D2

    if tb is None:
        tb = _pick_tile(B, 256, 8)
    if th is None:
        th = _pick_tile(H, 2048, 128)
    assert B % tb == 0 and H % th == 0

    itemsize = jnp.dtype(x.dtype).itemsize
    # Rough VMEM budget: double-buffered inputs/outputs + f32 accumulator.
    est = 2 * (tb * D + th * D + th + D) * itemsize
    est += 2 * (tb * D + tb * th) * itemsize
    est += tb * D * 4
    vmem_limit = int(min(max(2 * est, 32 * 1024 * 1024), 64 * 1024 * 1024))

    out_shapes = (
        jax.ShapeDtypeStruct((B, D), x.dtype),   # x_recon
        jax.ShapeDtypeStruct((B, H), x.dtype),   # h
    )

    grid = (B // tb, H // th)

    cost = pl.CostEstimate(
        flops=4 * B * H * D,
        transcendentals=0,
        bytes_accessed=(B * D + B * H + B * D) * itemsize
        + (H * D + H + D) * itemsize * grid[0],
    )

    return pl.pallas_call(
        sae_kernel,
        out_shape=out_shapes,
        grid_spec=pltpu.PrefetchScalarGridSpec(
            num_scalar_prefetch=0,
            grid=grid,
            in_specs=[
                pl.BlockSpec((tb, D), lambda i, k: (i, 0)),   # x
                pl.BlockSpec((th, D), lambda i, k: (k, 0)),   # W (tied)
                pl.BlockSpec((1, th), lambda i, k: (0, k)),   # b_enc
                pl.BlockSpec((1, D), lambda i, k: (0, 0)),    # b_dec
            ],
            out_specs=(
                pl.BlockSpec((tb, D), lambda i, k: (i, 0)),   # x_recon (resident over k)
                pl.BlockSpec((tb, th), lambda i, k: (i, k)),  # h
            ),
            scratch_shapes=[pltpu.VMEM((tb, D), jnp.float32)],
        ),
        compiler_params=pltpu.CompilerParams(
            dimension_semantics=("parallel", "arbitrary"),
            vmem_limit_bytes=vmem_limit,
        ),
        cost_estimate=cost,
    )(x, w_enc, b_enc.reshape(1, H), b_dec.reshape(1, D))


def init_params(key, input_dim, expansion_factor, dtype=jnp.float32):
    """Deterministic parameter init mirroring SimpleSAE.__init__."""
    hidden_dim = input_dim * expansion_factor
    # kaiming_uniform_(nonlinearity='relu'): bound = sqrt(3)*sqrt(2)/sqrt(fan_in)
    bound = math.sqrt(3.0) * math.sqrt(2.0) / math.sqrt(input_dim)
    w_enc = jax.random.uniform(
        key, (hidden_dim, input_dim), dtype=dtype, minval=-bound, maxval=bound
    )
    b_enc = jnp.zeros((hidden_dim,), dtype=dtype)
    b_dec = jnp.zeros((input_dim,), dtype=dtype)
    return w_enc, b_enc, b_dec


def reference_forward(x, w_enc, b_enc, b_dec):
    h = jnp.maximum(x @ w_enc.T + b_enc, 0.0)
    x_recon = h @ w_enc + b_dec
    return x_recon, h


if __name__ == "__main__":
    input_dim = 128
    expansion_factor = 4
    batch = 8

    key = jax.random.PRNGKey(0)
    k_w, k_x = jax.random.split(key)

    w_enc, b_enc, b_dec = init_params(k_w, input_dim, expansion_factor)
    x = jax.random.normal(k_x, (batch, input_dim), dtype=jnp.float32)

    # th=256 -> hidden grid of 2 steps, exercising the accumulation/finalize path.
    x_recon, h = jax.block_until_ready(
        simple_sae_forward(x, w_enc, b_enc, b_dec, tb=8, th=256)
    )

    # Sanity check against plain-JAX reference.
    x_recon_ref, h_ref = reference_forward(x, w_enc, b_enc, b_dec)
    assert x_recon.shape == (batch, input_dim)
    assert h.shape == (batch, input_dim * expansion_factor)
    assert jnp.allclose(x_recon, x_recon_ref, atol=1e-4, rtol=1e-4)
    assert jnp.allclose(h, h_ref, atol=1e-4, rtol=1e-4)

    print("KERNEL_OK")
</pallas_src>

<mosaic_0001>
module attributes {stable_mosaic.version = 11 : i64} {
  func.func @sae_kernel(%arg0: i32, %arg1: i32, %arg2: memref<8x128xf32, #tpu.memory_space<vmem>>, %arg3: memref<256x128xf32, #tpu.memory_space<vmem>>, %arg4: memref<1x256xf32, #tpu.memory_space<vmem>>, %arg5: memref<1x128xf32, #tpu.memory_space<vmem>>, %arg6: memref<8x128xf32, #tpu.memory_space<vmem>>, %arg7: memref<8x256xf32, #tpu.memory_space<vmem>>, %arg8: memref<8x128xf32, #tpu.memory_space<vmem>>) attributes {dimension_semantics = [#tpu.dimension_semantics<parallel>, #tpu.dimension_semantics<arbitrary>], iteration_bounds = array<i64: 1, 2>, scalar_prefetch = 0 : i64, scratch_operands = 1 : i64, tpu.core_type = #tpu.core_type<tc>, window_params = [{transform_indices = @transform_0, window_bounds = array<i64: 8, 128>}, {transform_indices = @transform_1, window_bounds = array<i64: 256, 128>}, {transform_indices = @transform_2, window_bounds = array<i64: 1, 256>}, {pipeline_mode = #tpu.pipeline_mode<synchronous>, transform_indices = @transform_3, window_bounds = array<i64: 1, 128>}, {transform_indices = @transform_4, window_bounds = array<i64: 8, 128>}, {transform_indices = @transform_5, window_bounds = array<i64: 8, 256>}]} {
    %c0_i32 = arith.constant 0 : i32
    %0 = arith.cmpi eq, %arg1, %c0_i32 : i32
    %1 = arith.extui %0 : i1 to i32
    %c0_i32_0 = arith.constant 0 : i32
    %2 = arith.cmpi ne, %1, %c0_i32_0 : i32
    scf.if %2 {
      %cst_15 = arith.constant 0.000000e+00 : f32
      %19 = vector.broadcast %cst_15 : f32 to vector<8x128xf32>
      %c0_16 = arith.constant 0 : index
      %c0_17 = arith.constant 0 : index
      %20 = vector.load %arg8[%c0_16, %c0_17] : memref<8x128xf32, #tpu.memory_space<vmem>>, vector<8x128xf32>
      tpu.vector_store %arg8[%c0_16, %c0_17], %19 {strides = array<i32>} : memref<8x128xf32, #tpu.memory_space<vmem>>, vector<8x128xf32>,
    } else {
    }
    %c0 = arith.constant 0 : index
    %c0_1 = arith.constant 0 : index
    %3 = vector.load %arg2[%c0, %c0_1] : memref<8x128xf32, #tpu.memory_space<vmem>>, vector<8x128xf32>
    %c0_2 = arith.constant 0 : index
    %c0_3 = arith.constant 0 : index
    %4 = vector.load %arg3[%c0_2, %c0_3] : memref<256x128xf32, #tpu.memory_space<vmem>>, vector<256x128xf32>
    %cst = arith.constant dense<0.000000e+00> : vector<8x256xf32>
    %5 = tpu.matmul %3, %4, %cst {dimension_numbers = #tpu.dot_dimension_numbers<[1], [1], [0], [0], [0, 0, 1, 0], [], []>} : vector<8x128xf32>, vector<256x128xf32>, vector<8x256xf32> -> vector<8x256xf32>
    %c0_4 = arith.constant 0 : index
    %c0_5 = arith.constant 0 : index
    %6 = vector.load %arg4[%c0_4, %c0_5] : memref<1x256xf32, #tpu.memory_space<vmem>>, vector<1x256xf32>
    %7 = vector.broadcast %6 : vector<1x256xf32> to vector<8x256xf32>
    %8 = arith.addf %5, %7 : vector<8x256xf32>
    %cst_6 = arith.constant 0.000000e+00 : f32
    %9 = vector.broadcast %cst_6 : f32 to vector<8x256xf32>
    %10 = arith.maximumf %8, %9 : vector<8x256xf32>
    %c0_7 = arith.constant 0 : index
    %c0_8 = arith.constant 0 : index
    %11 = vector.load %arg8[%c0_7, %c0_8] : memref<8x128xf32, #tpu.memory_space<vmem>>, vector<8x128xf32>
    %cst_9 = arith.constant dense<0.000000e+00> : vector<8x128xf32>
    %12 = tpu.matmul %10, %4, %cst_9 {dimension_numbers = #tpu.dot_dimension_numbers<[1], [0], [0], [1], [0, 0, 1, 1], [], []>} : vector<8x256xf32>, vector<256x128xf32>, vector<8x128xf32> -> vector<8x128xf32>
    %13 = arith.addf %11, %12 : vector<8x128xf32>
    %c0_10 = arith.constant 0 : index
    %c0_11 = arith.constant 0 : index
    %14 = vector.load %arg8[%c0_10, %c0_11] : memref<8x128xf32, #tpu.memory_space<vmem>>, vector<8x128xf32>
    tpu.vector_store %arg8[%c0_10, %c0_11], %13 {strides = array<i32>} : memref<8x128xf32, #tpu.memory_space<vmem>>, vector<8x128xf32>,
    %c0_12 = arith.constant 0 : index
    %c0_13 = arith.constant 0 : index
    %15 = vector.load %arg7[%c0_12, %c0_13] : memref<8x256xf32, #tpu.memory_space<vmem>>, vector<8x256xf32>
    tpu.vector_store %arg7[%c0_12, %c0_13], %10 {strides = array<i32>} : memref<8x256xf32, #tpu.memory_space<vmem>>, vector<8x256xf32>,
    %c1_i32 = arith.constant 1 : i32
    %16 = arith.cmpi eq, %arg1, %c1_i32 : i32
    %17 = arith.extui %16 : i1 to i32
    %c0_i32_14 = arith.constant 0 : i32
    %18 = arith.cmpi ne, %17, %c0_i32_14 : i32
    scf.if %18 {
      %c0_15 = arith.constant 0 : index
      %c0_16 = arith.constant 0 : index
      %19 = vector.load %arg8[%c0_15, %c0_16] : memref<8x128xf32, #tpu.memory_space<vmem>>, vector<8x128xf32>
      %c0_17 = arith.constant 0 : index
      %c0_18 = arith.constant 0 : index
      %20 = vector.load %arg5[%c0_17, %c0_18] : memref<1x128xf32, #tpu.memory_space<vmem>>, vector<1x128xf32>
      %21 = vector.broadcast %20 : vector<1x128xf32> to vector<8x128xf32>
      %22 = arith.addf %19, %21 : vector<8x128xf32>
      %c0_19 = arith.constant 0 : index
      %c0_20 = arith.constant 0 : index
      %23 = vector.load %arg6[%c0_19, %c0_20] : memref<8x128xf32, #tpu.memory_space<vmem>>, vector<8x128xf32>
      tpu.vector_store %arg6[%c0_19, %c0_20], %22 {strides = array<i32>} : memref<8x128xf32, #tpu.memory_space<vmem>>, vector<8x128xf32>,
    } else {
    }
    return
  }
  func.func @transform_0(%arg0: i32, %arg1: i32) -> (i32, i32) {
    %c0_i32 = arith.constant 0 : i32
    %c0_i32_0 = arith.constant 0 : i32
    return %arg0, %c0_i32 : i32, i32
  }
  func.func @transform_1(%arg0: i32, %arg1: i32) -> (i32, i32) {
    %c0_i32 = arith.constant 0 : i32
    %c0_i32_0 = arith.constant 0 : i32
    return %arg1, %c0_i32 : i32, i32
  }
  func.func @transform_2(%arg0: i32, %arg1: i32) -> (i32, i32) {
    %c0_i32 = arith.constant 0 : i32
    %c0_i32_0 = arith.constant 0 : i32
    return %c0_i32, %arg1 : i32, i32
  }
  func.func @transform_3(%arg0: i32, %arg1: i32) -> (i32, i32) {
    %c0_i32 = arith.constant 0 : i32
    %c0_i32_0 = arith.constant 0 : i32
    %c0_i32_1 = arith.constant 0 : i32
    return %c0_i32, %c0_i32_0 : i32, i32
  }
  func.func @transform_4(%arg0: i32, %arg1: i32) -> (i32, i32) {
    %c0_i32 = arith.constant 0 : i32
    %c0_i32_0 = arith.constant 0 : i32
    return %arg0, %c0_i32 : i32, i32
  }
  func.func @transform_5(%arg0: i32, %arg1: i32) -> (i32, i32) {
    %c0_i32 = arith.constant 0 : i32
    return %arg0, %arg1 : i32, i32
  }
}

</mosaic_0001>

<llo_original>
// kernel: tpu_custom_call.1
$region0: #{tpu_custom_call.1}
  #allocation0 [shape = 'u32[]', space=smem, size = 0x4, offset = 0x4, fixed_abs, tag = 'smem constant byte address 0x4 - core index']
  #allocation1 [shape = 'u32[144,128]{1,0:T(1,128)}', space=vmem, size = 0x12000, scoped, tag = 'internal scratch']
  #allocation2 [shape = 'f32[8,128]{1,0:T(8,128)}', space=vmem, size = 0x1000, scoped, tag = 'scratch operand']
  %s0 = inlined_call_operand.hbm [shape: f32[8,128], index: 0, kind: input, shape index: {}]
  %s1 = inlined_call_operand.hbm [shape: f32[512,128], index: 1, kind: input, shape index: {}]
  %s2 = inlined_call_operand.hbm [shape: f32[1,512], index: 2, kind: input, shape index: {}]
  %s3 = inlined_call_operand.vmem [shape: f32[1,128], index: 3, kind: input, shape index: {}]
  %s4 = inlined_call_operand.hbm [shape: f32[8,128], index: 4, kind: output, shape index: {0}]
  %s5 = inlined_call_operand.hbm [shape: f32[8,512], index: 5, kind: output, shape index: {1}]
  %6 = xla_tuple %s4, %s5
  %s7 = sld [smem:[#allocation0]]
  $region77: #{tpu_custom_call.1} parent=0
    _
  %s9 = ssub.s32 1, %s7
  %s10 = scalar_select 0, %s9, %s7
  $region1: #{tpu_custom_call.1} parent=0
    #allocation3 [shape = 'u8[4096]{0}', space=vmem, size = 0x1000, scoped, tag = 'input window, operand 0, single buffered']
    #allocation4 [shape = 's32[2]{0}', space=sflag, size = 0x8, scoped, tag = 'scoped memory for tpu_custom_call.1']
    #allocation5 [shape = 's32[2]{0}', space=sflag, size = 0x8, scoped, tag = 'scoped memory for tpu_custom_call.1']
    #allocation6 [shape = 'u8[262144]{0}', space=vmem, size = 0x40000, scoped, tag = 'input window, operand 1']
    #allocation7 [shape = 's32[2]{0}', space=sflag, size = 0x8, scoped, tag = 'scoped memory for tpu_custom_call.1']
    #allocation8 [shape = 'u8[2048]{0}', space=vmem, size = 0x800, scoped, tag = 'input window, operand 2']
    #allocation9 [shape = 'u8[4096]{0}', space=vmem, size = 0x1000, scoped, tag = 'output window, operand 0, single buffered']
    #allocation10 [shape = 'u8[16384]{0}', space=vmem, size = 0x4000, scoped, tag = 'output window, operand 1']
    #allocation11 [shape = 's32[2]{0}', space=sflag, size = 0x8, scoped, tag = 'scoped memory for tpu_custom_call.1']
    %11 = vsyncpa [#allocation4], 0
    %12 = vsyncpa [#allocation7], 0
    %s13 = scalar_lea.sflag [#allocation7], 1
    %14 = vsyncpa %s13, 0
    %15 = vsyncpa [#allocation5], 0
    %16 = vsyncpa [#allocation11], 0
    %s17 = scalar_lea.sflag [#allocation11], 1
    %18 = vsyncpa %s17, 0
    loop: start=0, step=1, limit=4
    $region2: #{tpu_custom_call.1} parent=1 // loop_pre_header
      _
    $region3: #{tpu_custom_call.1} parent=1 // loop_header
      %s20 = sphi 0, %s24
      %p21 = scmp.ge.s32.totalorder %s20, 4
      %s27 = sphi 0, %s39
      %s28 = sphi 0, %s35
      %s29 = sphi 0, %s27
      %s30 = sphi 0, %s28
      %s31 = sphi 0, %s29
      %s32 = sphi 0, %s30
      %s42 = sphi 0, %s44
      %s45 = sphi 0, %s42
      %s46 = sphi 0, %s45
      %s62 = sphi 0, %s46
      %s68 = sphi 0, %s70
      %s71 = sphi 0, %s68
      %s72 = sphi 0, %s71
      %s88 = sphi 0, %s72
      %s94 = sphi 0, %s96
      %s97 = sphi 0, %s94
      %s98 = sphi 0, %s97
      %s114 = sphi 0, %s98
      %s118 = sphi 0, %s118
      %s120 = sphi 0, %s118
      %s121 = sphi 0, %s120
      %s135 = sphi 0, %s121
      %s141 = sphi 0, %s143
      %s144 = sphi 0, %s141
      %s145 = sphi 0, %s144
      %s161 = sphi 0, %s145
      %s169 = sphi 0, %s171
      %s172 = sphi 0, %s169
      %s173 = sphi 0, %s172
      %s189 = sphi 0, %s173
    $region4: #{tpu_custom_call.1} parent=1 // loop_header_branch
      %23 = sbr.rel (%p21) target = $region8
    $region5: #{tpu_custom_call.1} parent=1 // loop_body
      %s25 = ssub.s32 %s20, 1
      %s26 = ssub.s32 %s20, 2
      %s33 = sadd.s32 1, %s28
      %p34 = scmp.ge.s32.totalorder %s33, 2
      %s35 = scalar_select %p34, 0, %s33
      %s36 = sadd.s32 1, %s27
      %s37 = scalar_select %p34, %s36, %s27
      %p38 = scmp.ge.s32.totalorder %s37, 1
      %s39 = scalar_select %p38, 0, %s37
      %s40 = ssub.s32 %s27, %s39
      %p41 = scmp.eq.s32.totalorder %s40, 0
      %s43 = sadd.s32 %s42, 1
      %s44 = scalar_select %p41, %s42, %s43
      %p47 = pneg %p41
      %p48 = scmp.eq.s32.totalorder %s20, 1
      %p49 = por %p47, %p48
      %p50 = scmp.ne.s32.totalorder %s42, %s45
      %p51 = scmp.eq.s32.totalorder %s20, 0
      %p52 = por %p50, %p51
      %p53 = scmp.ne.s32.totalorder %s42, %s45
      %p54 = scmp.eq.s32.totalorder %s25, 1
      %p55 = por %p53, %p54
      %p56 = scmp.ne.s32.totalorder %s45, %s46
      %p57 = scmp.eq.s32.totalorder %s25, 0
      %p58 = por %p56, %p57
      %p59 = scmp.ne.s32.totalorder %s45, %s46
      %p60 = scmp.eq.s32.totalorder %s26, 1
      %p61 = por %p59, %p60
      %p63 = scmp.ne.s32.totalorder %s46, %s62
      %p64 = scmp.eq.s32.totalorder %s26, 0
      %p65 = por %p63, %p64
      %s66 = ssub.s32 %s28, %s35
      %p67 = scmp.eq.s32.totalorder %s66, 0
      %s69 = sadd.s32 %s68, 1
      %s70 = scalar_select %p67, %s68, %s69
      %p73 = pneg %p67
      %p74 = scmp.eq.s32.totalorder %s20, 1
      %p75 = por %p73, %p74
      %p76 = scmp.ne.s32.totalorder %s68, %s71
      %p77 = scmp.eq.s32.totalorder %s20, 0
      %p78 = por %p76, %p77
      %p79 = scmp.ne.s32.totalorder %s68, %s71
      %p80 = scmp.eq.s32.totalorder %s25, 1
      %p81 = por %p79, %p80
      %p82 = scmp.ne.s32.totalorder %s71, %s72
      %p83 = scmp.eq.s32.totalorder %s25, 0
      %p84 = por %p82, %p83
      %p85 = scmp.ne.s32.totalorder %s71, %s72
      %p86 = scmp.eq.s32.totalorder %s26, 1
      %p87 = por %p85, %p86
      %p89 = scmp.ne.s32.totalorder %s72, %s88
      %p90 = scmp.eq.s32.totalorder %s26, 0
      %p91 = por %p89, %p90
      %s92 = ssub.s32 %s28, %s35
      %p93 = scmp.eq.s32.totalorder %s92, 0
      %s95 = sadd.s32 %s94, 1
      %s96 = scalar_select %p93, %s94, %s95
      %p99 = pneg %p93
      %p100 = scmp.eq.s32.totalorder %s20, 1
      %p101 = por %p99, %p100
      %p102 = scmp.ne.s32.totalorder %s94, %s97
      %p103 = scmp.eq.s32.totalorder %s20, 0
      %p104 = por %p102, %p103
      %p105 = scmp.ne.s32.totalorder %s94, %s97
      %p106 = scmp.eq.s32.totalorder %s25, 1
      %p107 = por %p105, %p106
      %p108 = scmp.ne.s32.totalorder %s97, %s98
      %p109 = scmp.eq.s32.totalorder %s25, 0
      %p110 = por %p108, %p109
      %p111 = scmp.ne.s32.totalorder %s97, %s98
      %p112 = scmp.eq.s32.totalorder %s26, 1
      %p113 = por %p111, %p112
      %p115 = scmp.ne.s32.totalorder %s98, %s114
      %p116 = scmp.eq.s32.totalorder %s26, 0
      %p117 = por %p115, %p116
      %s119 = sadd.s32 %s118, 1
      %p122 = scmp.eq.s32.totalorder %s20, 1
      %p123 = scmp.ne.s32.totalorder %s118, %s120
      %p124 = scmp.eq.s32.totalorder %s20, 0
      %p125 = por %p123, %p124
      %p126 = scmp.ne.s32.totalorder %s118, %s120
      %p127 = scmp.eq.s32.totalorder %s25, 1
      %p128 = por %p126, %p127
      %p129 = scmp.ne.s32.totalorder %s120, %s121
      %p130 = scmp.eq.s32.totalorder %s25, 0
      %p131 = por %p129, %p130
      %p132 = scmp.ne.s32.totalorder %s120, %s121
      %p133 = scmp.eq.s32.totalorder %s26, 1
      %p134 = por %p132, %p133
      %p136 = scmp.ne.s32.totalorder %s121, %s135
      %p137 = scmp.eq.s32.totalorder %s26, 0
      %p138 = por %p136, %p137
      %s139 = ssub.s32 %s27, %s39
      %p140 = scmp.eq.s32.totalorder %s139, 0
      %s142 = sadd.s32 %s141, 1
      %s143 = scalar_select %p140, %s141, %s142
      %p146 = pneg %p140
      %p147 = scmp.eq.s32.totalorder %s20, 1
      %p148 = por %p146, %p147
      %p149 = scmp.ne.s32.totalorder %s141, %s144
      %p150 = scmp.eq.s32.totalorder %s20, 0
      %p151 = por %p149, %p150
      %p152 = scmp.ne.s32.totalorder %s141, %s144
      %p153 = scmp.eq.s32.totalorder %s25, 1
      %p154 = por %p152, %p153
      %p155 = scmp.ne.s32.totalorder %s144, %s145
      %p156 = scmp.eq.s32.totalorder %s25, 0
      %p157 = por %p155, %p156
      %p158 = scmp.ne.s32.totalorder %s144, %s145
      %p159 = scmp.eq.s32.totalorder %s26, 1
      %p160 = por %p158, %p159
      %p162 = scmp.ne.s32.totalorder %s145, %s161
      %p163 = scmp.eq.s32.totalorder %s26, 0
      %p164 = por %p162, %p163
      %s165 = ssub.s32 %s27, %s39
      %s166 = ssub.s32 %s28, %s35
      %s167 = sor.u32 %s165, %s166
      %p168 = scmp.eq.s32.totalorder %s167, 0
      %s170 = sadd.s32 %s169, 1
      %s171 = scalar_select %p168, %s169, %s170
      %p174 = pneg %p168
      %p175 = scmp.eq.s32.totalorder %s20, 1
      %p176 = por %p174, %p175
      %p177 = scmp.ne.s32.totalorder %s169, %s172
      %p178 = scmp.eq.s32.totalorder %s20, 0
      %p179 = por %p177, %p178
      %p180 = scmp.ne.s32.totalorder %s169, %s172
      %p181 = scmp.eq.s32.totalorder %s25, 1
      %p182 = por %p180, %p181
      %p183 = scmp.ne.s32.totalorder %s172, %s173
      %p184 = scmp.eq.s32.totalorder %s25, 0
      %p185 = por %p183, %p184
      %p186 = scmp.ne.s32.totalorder %s172, %s173
      %p187 = scmp.eq.s32.totalorder %s26, 1
      %p188 = por %p186, %p187
      %p190 = scmp.ne.s32.totalorder %s173, %s189
      %p191 = scmp.eq.s32.totalorder %s26, 0
      %p192 = por %p190, %p191
      %p193 = scmp.le.s32.totalorder 1, %s20
      %p194 = scmp.lt.s32.totalorder %s20, 3
      %p195 = pnand %p193, %p194
      %p196 = pneg %p195
      // Predicated region
      $region9: #{tpu_custom_call.1} parent=5 // pred_check
        _
      $region10: #{tpu_custom_call.1} parent=5 // pred_check_branch
        %198 = sbr.rel (%p195) target = $region12
      $region11: #{tpu_custom_call.1} parent=5 // pred_region
        %s199 = ssub.s32 %s20, 1
        // Predicated region
        $region13: #{tpu_custom_call.1} parent=11 // pred_check
          %p200 = pneg %p58
        $region14: #{tpu_custom_call.1} parent=11 // pred_check_branch
          %202 = sbr.rel (%p200) target = $region16
        $region15: #{tpu_custom_call.1} parent=11 // pred_region
          %s204 = ssub.s32 128, 128
          %205 = vsyncadd [#allocation4], %s204
          %s206 = smul.addr %s29, 128
          %s207 = scalar_lea.hbm %s0, %s206
          %s209 = sshll.u32 [#allocation3], 4
          %s210 = int_to_ptr.vmem [resolvable:$true] %s209
          %212 = dma.hbm_to_vmem [thread:$0]  %s207, 128, %s210, [#allocation4]
        $region16: #{tpu_custom_call.1} parent=11 // pred_fallthru
          _
        // Predicated region
        $region17: #{tpu_custom_call.1} parent=11 // pred_check
          %p213 = pneg %p131
        $region18: #{tpu_custom_call.1} parent=11 // pred_check_branch
          %215 = sbr.rel (%p213) target = $region20
        $region19: #{tpu_custom_call.1} parent=11 // pred_region
          _
        $region20: #{tpu_custom_call.1} parent=11 // pred_fallthru
          _
      $region12: #{tpu_custom_call.1} parent=5 // pred_fallthru
        _
      %p216 = scmp.lt.s32.totalorder %s20, 2
      // Predicated region
      $region21: #{tpu_custom_call.1} parent=5 // pred_check
        %p217 = pneg %p216
      $region22: #{tpu_custom_call.1} parent=5 // pred_check_branch
        %219 = sbr.rel (%p217) target = $region24
      $region23: #{tpu_custom_call.1} parent=5 // pred_region
        // Predicated region
        $region25: #{tpu_custom_call.1} parent=23 // pred_check
          %p220 = pneg %p78
        $region26: #{tpu_custom_call.1} parent=23 // pred_check_branch
          %222 = sbr.rel (%p220) target = $region28
        $region27: #{tpu_custom_call.1} parent=23 // pred_region
          %s223 = sand.u32 %s20, 1
          %s224 = scalar_lea.sflag [#allocation7], %s223
          %s225 = sand.u32 %s68, 1
          %s226 = smul.addr %s225, 256
          %s227 = scalar_lea.vmem [#allocation6], %s226
          %s228 = smul.u32 32, %s28
          %s230 = ssub.s32 4096, 4096
          %231 = vsyncadd %s224, %s230
          %s232 = smul.addr %s228, 128
          %s233 = scalar_lea.hbm %s1, %s232
          %s234 = sshll.u32 %s227, 4
          %s235 = int_to_ptr.vmem [resolvable:$true] %s234
          %240 = dma.hbm_to_vmem [thread:$0]  %s233, 4096, %s235, %s224, 128, 128, 8
        $region28: #{tpu_custom_call.1} parent=23 // pred_fallthru
          _
        // Predicated region
        $region29: #{tpu_custom_call.1} parent=23 // pred_check
          %p241 = pneg %p104
        $region30: #{tpu_custom_call.1} parent=23 // pred_check_branch
          %243 = sbr.rel (%p241) target = $region32
        $region31: #{tpu_custom_call.1} parent=23 // pred_region
          %s244 = sand.u32 %s20, 1
          %s245 = scalar_lea.sflag [#allocation7], %s244
          %s246 = sand.u32 %s94, 1
          %s247 = smul.addr %s246, 2
          %s248 = scalar_lea.vmem [#allocation8], %s247
          %s249 = smul.u32 2, %s28
          %s251 = ssub.s32 32, 32
          %252 = vsyncadd %s245, %s251
          %s253 = smul.addr %s249, 16
          %s254 = scalar_lea.hbm %s2, %s253
          %s256 = sshll.u32 %s248, 4
          %s257 = int_to_ptr.vmem [resolvable:$true] %s256
          %259 = dma.hbm_to_vmem [thread:$0]  %s254, 32, %s257, %s245
        $region32: #{tpu_custom_call.1} parent=23 // pred_fallthru
          _
      $region24: #{tpu_custom_call.1} parent=5 // pred_fallthru
        _
      %p260 = scmp.le.s32.totalorder 1, %s20
      %p261 = scmp.lt.s32.totalorder %s20, 3
      %p262 = pnand %p260, %p261
      %p263 = pneg %p262
      // Predicated region
      $region33: #{tpu_custom_call.1} parent=5 // pred_check
        _
      $region34: #{tpu_custom_call.1} parent=5 // pred_check_branch
        %265 = sbr.rel (%p262) target = $region36
      $region35: #{tpu_custom_call.1} parent=5 // pred_region
        %s266 = ssub.s32 %s20, 1
        // Predicated region
        $region37: #{tpu_custom_call.1} parent=35 // pred_check
          %p267 = pneg %p58
        $region38: #{tpu_custom_call.1} parent=35 // pred_check_branch
          %269 = sbr.rel (%p267) target = $region40
        $region39: #{tpu_custom_call.1} parent=35 // pred_region
          %270 = dma.done [#allocation4], 128
        $region40: #{tpu_custom_call.1} parent=35 // pred_fallthru
          _
        %s271 = sand.u32 %s25, 1
        %s272 = scalar_lea.sflag [#allocation7], %s271
        %s273 = sand.u32 %s71, 1
        %s274 = smul.addr %s273, 256
        %s275 = scalar_lea.vmem [#allocation6], %s274
        // Predicated region
        $region41: #{tpu_custom_call.1} parent=35 // pred_check
          %p276 = pneg %p84
        $region42: #{tpu_custom_call.1} parent=35 // pred_check_branch
          %278 = sbr.rel (%p276) target = $region44
        $region43: #{tpu_custom_call.1} parent=35 // pred_region
          %279 = dma.done %s272, 4096
        $region44: #{tpu_custom_call.1} parent=35 // pred_fallthru
          _
        %s280 = sand.u32 %s25, 1
        %s281 = scalar_lea.sflag [#allocation7], %s280
        %s282 = sand.u32 %s97, 1
        %s283 = smul.addr %s282, 2
        %s284 = scalar_lea.vmem [#allocation8], %s283
        // Predicated region
        $region45: #{tpu_custom_call.1} parent=35 // pred_check
          %p285 = pneg %p110
        $region46: #{tpu_custom_call.1} parent=35 // pred_check_branch
          %287 = sbr.rel (%p285) target = $region48
        $region47: #{tpu_custom_call.1} parent=35 // pred_region
          %288 = dma.done %s281, 32
        $region48: #{tpu_custom_call.1} parent=35 // pred_fallthru
          _
        %p289 = pneg %p58
        %p290 = pneg %p55
        %s291 = sand.u32 %s25, 1
        %s292 = scalar_lea.sflag [#allocation7], %s291
        %s293 = sand.u32 %s71, 1
        %s294 = smul.addr %s293, 256
        %s295 = scalar_lea.vmem [#allocation6], %s294
        %p296 = pneg %p84
        %p297 = pneg %p81
        %s298 = sand.u32 %s25, 1
        %s299 = scalar_lea.sflag [#allocation7], %s298
        %s300 = sand.u32 %s97, 1
        %s301 = smul.addr %s300, 2
        %s302 = scalar_lea.vmem [#allocation8], %s301
        %p303 = pneg %p110
        %p304 = pneg %p107
        %p305 = pneg %p131
        %p306 = pneg %p128
        %p307 = pneg %p157
        %p308 = pneg %p154
        %p309 = pneg %p185
        %p310 = pneg %p182
        %s311 = sand.u32 %s172, 1
        %s312 = scalar_lea.sflag [#allocation11], %s311
        %s313 = sand.u32 %s172, 1
        %s314 = smul.addr %s313, 16
        %s315 = scalar_lea.vmem [#allocation10], %s314
        %s316 = smul.u32 32, %s30
        %s317 = smul.u32 2, %s30
        %s318 = smul.u32 2, %s30
        %p319 = scmp.eq.s32.totalorder %s30, 0
        // Predicated region
        $region49: #{tpu_custom_call.1} parent=35 // pred_check
          %p320 = pneg %p319
        $region50: #{tpu_custom_call.1} parent=35 // pred_check_branch
          %322 = sbr.rel (%p320) target = $region52
        $region51: #{tpu_custom_call.1} parent=35 // pred_region
          %323 = vst [vmem:[#allocation2] sm:$0xff] 0.0
        $region52: #{tpu_custom_call.1} parent=35 // pred_fallthru
          _
        %v324 = vld [vmem:[#allocation3] sm:$0xff]
        %v325 = vld [vmem:[%s275] sm:$0xff]
        %v326 = vld [vmem:[%s275 + $0x8] sm:$0xff]
        %v327 = vld [vmem:[%s275 + $0x10] sm:$0xff]
        %v328 = vld [vmem:[%s275 + $0x18] sm:$0xff]
        %v329 = vld [vmem:[%s275 + $0x20] sm:$0xff]
        %v330 = vld [vmem:[%s275 + $0x28] sm:$0xff]
        %v331 = vld [vmem:[%s275 + $0x30] sm:$0xff]
        %v332 = vld [vmem:[%s275 + $0x38] sm:$0xff]
        %v333 = vld [vmem:[%s275 + $0x40] sm:$0xff]
        %v334 = vld [vmem:[%s275 + $0x48] sm:$0xff]
        %v335 = vld [vmem:[%s275 + $0x50] sm:$0xff]
        %v336 = vld [vmem:[%s275 + $0x58] sm:$0xff]
        %v337 = vld [vmem:[%s275 + $0x60] sm:$0xff]
        %v338 = vld [vmem:[%s275 + $0x68] sm:$0xff]
        %v339 = vld [vmem:[%s275 + $0x70] sm:$0xff]
        %v340 = vld [vmem:[%s275 + $0x78] sm:$0xff]
        %v341 = vld [vmem:[%s275 + $0x80] sm:$0xff]
        %v342 = vld [vmem:[%s275 + $0x88] sm:$0xff]
        %v343 = vld [vmem:[%s275 + $0x90] sm:$0xff]
        %v344 = vld [vmem:[%s275 + $0x98] sm:$0xff]
        %v345 = vld [vmem:[%s275 + $0xa0] sm:$0xff]
        %v346 = vld [vmem:[%s275 + $0xa8] sm:$0xff]
        %v347 = vld [vmem:[%s275 + $0xb0] sm:$0xff]
        %v348 = vld [vmem:[%s275 + $0xb8] sm:$0xff]
        %v349 = vld [vmem:[%s275 + $0xc0] sm:$0xff]
        %v350 = vld [vmem:[%s275 + $0xc8] sm:$0xff]
        %v351 = vld [vmem:[%s275 + $0xd0] sm:$0xff]
        %v352 = vld [vmem:[%s275 + $0xd8] sm:$0xff]
        %v353 = vld [vmem:[%s275 + $0xe0] sm:$0xff]
        %v354 = vld [vmem:[%s275 + $0xe8] sm:$0xff]
        %v355 = vld [vmem:[%s275 + $0xf0] sm:$0xff]
        %v356 = vld [vmem:[%s275 + $0xf8] sm:$0xff]
        %v357 = vld [vmem:[%s284] sm:$0x3]
        %v359 = vlaneseq
        %v360 = vshrl.u32 %v359, 7
        %v361 = vsub.s32 0, %v360
        %v362 = vrot.slane %v357, %v361
        %v363 = vlaneseq
        %v364 = vshrl.u32 %v363, 7
        %v365 = vsub.s32 1, %v364
        %v366 = vrot.slane %v357, %v365
        %369 = vmatprep.subr.mxu0 0.0
        %370 = vmatpush1.xpose.msra.mxu0 %v340
        %371 = vmatprep.subr.mxu0 0.0
        %372 = vmatpush1.xpose.msra.mxu0 %v339
        %373 = vmatprep.subr.mxu0 0.0
        %374 = vmatpush1.xpose.msra.mxu0 %v338
        %375 = vmatprep.subr.mxu0 0.0
        %376 = vmatpush1.xpose.msra.mxu0 %v337
        %377 = vmatprep.subr.mxu0 0.0
        %378 = vmatpush1.xpose.msra.mxu0 %v336
        %379 = vmatprep.subr.mxu0 0.0
        %380 = vmatpush1.xpose.msra.mxu0 %v335
        %381 = vmatprep.subr.mxu0 0.0
        %382 = vmatpush1.xpose.msra.mxu0 %v334
        %383 = vmatprep.subr.mxu0 0.0
        %384 = vmatpush1.xpose.msra.mxu0 %v333
        %385 = vmatprep.subr.mxu0 0.0
        %386 = vmatpush1.xpose.msra.mxu0 %v332
        %387 = vmatprep.subr.mxu0 0.0
        %388 = vmatpush1.xpose.msra.mxu0 %v331
        %389 = vmatprep.subr.mxu0 0.0
        %390 = vmatpush1.xpose.msra.mxu0 %v330
        %391 = vmatprep.subr.mxu0 0.0
        %392 = vmatpush1.xpose.msra.mxu0 %v329
        %393 = vmatprep.subr.mxu0 0.0
        %394 = vmatpush1.xpose.msra.mxu0 %v328
        %395 = vmatprep.subr.mxu0 0.0
        %396 = vmatpush1.xpose.msra.mxu0 %v327
        %397 = vmatprep.subr.mxu0 0.0
        %398 = vmatpush1.xpose.msra.mxu0 %v326
        %399 = vmatprep.subr.mxu0 0.0
        %400 = vmatpush1.xpose.msra.mxu0 %v325
        %401 = vmatprep.subr.mxu0 0.0
        %402 = vmatpush2.xpose.msra.mxu0 %v356
        %403 = vmatprep.subr.mxu0 0.0
        %404 = vmatpush2.xpose.msra.mxu0 %v355
        %405 = vmatprep.subr.mxu0 0.0
        %406 = vmatpush2.xpose.msra.mxu0 %v354
        %407 = vmatprep.subr.mxu0 0.0
        %408 = vmatpush2.xpose.msra.mxu0 %v353
        %409 = vmatprep.subr.mxu0 0.0
        %410 = vmatpush2.xpose.msra.mxu0 %v352
        %411 = vmatprep.subr.mxu0 0.0
        %412 = vmatpush2.xpose.msra.mxu0 %v351
        %413 = vmatprep.subr.mxu0 0.0
        %414 = vmatpush2.xpose.msra.mxu0 %v350
        %415 = vmatprep.subr.mxu0 0.0
        %416 = vmatpush2.xpose.msra.mxu0 %v349
        %417 = vmatprep.subr.mxu0 0.0
        %418 = vmatpush2.xpose.msra.mxu0 %v348
        %419 = vmatprep.subr.mxu0 0.0
        %420 = vmatpush2.xpose.msra.mxu0 %v347
        %421 = vmatprep.subr.mxu0 0.0
        %422 = vmatpush2.xpose.msra.mxu0 %v346
        %423 = vmatprep.subr.mxu0 0.0
        %424 = vmatpush2.xpose.msra.mxu0 %v345
        %425 = vmatprep.subr.mxu0 0.0
        %426 = vmatpush2.xpose.msra.mxu0 %v344
        %427 = vmatprep.subr.mxu0 0.0
        %428 = vmatpush2.xpose.msra.mxu0 %v343
        %429 = vmatprep.subr.mxu0 0.0
        %430 = vmatpush2.xpose.msra.mxu0 %v342
        %431 = vmatprep.subr.mxu0 0.0
        %432 = vmatpush2.xpose.msra.mxu0 %v341
        %433 = vmatprep.mubr.f32.mxu0 0.0
        %434 = vmatmul.mubr.f32.gmra.mxu0 %v324
        %v435 = vpop.f32.mrf.mxu0
        %v436 = vadd.f32 %v362, %v435
        %v437 = vpop.f32.mrf.mxu0
        %v438 = vadd.f32 %v366, %v437
        %439 = vdwg.mxu0
        %v440 = vmax.f32 %v436, 0.0
        %v441 = vmax.f32 %v438, 0.0
        %v442 = vld [vmem:[#allocation2] sm:$0xff]
        %443 = vmatprep.subr.mxu0 0.0
        %444 = vmatpush1.msra.mxu0 %v340
        %445 = vmatprep.subr.mxu0 0.0
        %446 = vmatpush1.msra.mxu0 %v339
        %447 = vmatprep.subr.mxu0 0.0
        %448 = vmatpush1.msra.mxu0 %v338
        %449 = vmatprep.subr.mxu0 0.0
        %450 = vmatpush1.msra.mxu0 %v337
        %451 = vmatprep.subr.mxu0 0.0
        %452 = vmatpush1.msra.mxu0 %v336
        %453 = vmatprep.subr.mxu0 0.0
        %454 = vmatpush1.msra.mxu0 %v335
        %455 = vmatprep.subr.mxu0 0.0
        %456 = vmatpush1.msra.mxu0 %v334
        %457 = vmatprep.subr.mxu0 0.0
        %458 = vmatpush1.msra.mxu0 %v333
        %459 = vmatprep.subr.mxu0 0.0
        %460 = vmatpush1.msra.mxu0 %v332
        %461 = vmatprep.subr.mxu0 0.0
        %462 = vmatpush1.msra.mxu0 %v331
        %463 = vmatprep.subr.mxu0 0.0
        %464 = vmatpush1.msra.mxu0 %v330
        %465 = vmatprep.subr.mxu0 0.0
        %466 = vmatpush1.msra.mxu0 %v329
        %467 = vmatprep.subr.mxu0 0.0
        %468 = vmatpush1.msra.mxu0 %v328
        %469 = vmatprep.subr.mxu0 0.0
        %470 = vmatpush1.msra.mxu0 %v327
        %471 = vmatprep.subr.mxu0 0.0
        %472 = vmatpush1.msra.mxu0 %v326
        %473 = vmatprep.subr.mxu0 0.0
        %474 = vmatpush1.msra.mxu0 %v325
        %475 = vmatprep.subr.mxu0 0.0
        %476 = vmatpush2.msra.mxu0 %v356
        %477 = vmatprep.subr.mxu0 0.0
        %478 = vmatpush2.msra.mxu0 %v355
        %479 = vmatprep.subr.mxu0 0.0
        %480 = vmatpush2.msra.mxu0 %v354
        %481 = vmatprep.subr.mxu0 0.0
        %482 = vmatpush2.msra.mxu0 %v353
        %483 = vmatprep.subr.mxu0 0.0
        %484 = vmatpush2.msra.mxu0 %v352
        %485 = vmatprep.subr.mxu0 0.0
        %486 = vmatpush2.msra.mxu0 %v351
        %487 = vmatprep.subr.mxu0 0.0
        %488 = vmatpush2.msra.mxu0 %v350
        %489 = vmatprep.subr.mxu0 0.0
        %490 = vmatpush2.msra.mxu0 %v349
        %491 = vmatprep.subr.mxu0 0.0
        %492 = vmatpush2.msra.mxu0 %v348
        %493 = vmatprep.subr.mxu0 0.0
        %494 = vmatpush2.msra.mxu0 %v347
        %495 = vmatprep.subr.mxu0 0.0
        %496 = vmatpush2.msra.mxu0 %v346
        %497 = vmatprep.subr.mxu0 0.0
        %498 = vmatpush2.msra.mxu0 %v345
        %499 = vmatprep.subr.mxu0 0.0
        %500 = vmatpush2.msra.mxu0 %v344
        %501 = vmatprep.subr.mxu0 0.0
        %502 = vmatpush2.msra.mxu0 %v343
        %503 = vmatprep.subr.mxu0 0.0
        %504 = vmatpush2.msra.mxu0 %v342
        %505 = vmatprep.subr.mxu0 0.0
        %506 = vmatpush2.msra.mxu0 %v341
        %507 = vmatprep.mubr.f32.mxu0 %v441
        %508 = vmatmul.mubr.f32.gmra.mxu0 %v440
        %v509 = vpop.f32.mrf.mxu0
        %v510 = vadd.f32 0.0, %v509
        %v511 = vpop.f32.mrf.mxu0
        %512 = vdwg.mxu0
        %v513 = vadd.f32 %v442, %v510
        %514 = vst [vmem:[#allocation2] sm:$0xff] %v513
        %515 = vst [vmem:[%s315] sm:$0xff] %v440
        %516 = vst [vmem:[%s315 + $0x8] sm:$0xff] %v441
        %p517 = scmp.eq.s32.totalorder %s30, 1
        // Predicated region
        $region53: #{tpu_custom_call.1} parent=35 // pred_check
          %p518 = pneg %p517
        $region54: #{tpu_custom_call.1} parent=35 // pred_check_branch
          %520 = sbr.rel (%p518) target = $region56
        $region55: #{tpu_custom_call.1} parent=35 // pred_region
          %v521 = vld [vmem:[#allocation2] sm:$0xff]
          %v522 = vld [vmem:[%s3] sm:$0x1]
          %v524 = vlaneseq
          %v525 = vshrl.u32 %v524, 7
          %v526 = vsub.s32 0, %v525
          %v527 = vrot.slane %v522, %v526
          %v529 = vadd.f32 %v521, %v527
          %530 = vst [vmem:[#allocation9] sm:$0xff] %v529
        $region56: #{tpu_custom_call.1} parent=35 // pred_fallthru
          _
        %s531 = sand.u32 %s172, 1
        %s532 = scalar_lea.sflag [#allocation11], %s531
        %s533 = sand.u32 %s172, 1
        %s534 = smul.addr %s533, 16
        %s535 = scalar_lea.vmem [#allocation10], %s534
        // Predicated region
        $region57: #{tpu_custom_call.1} parent=35 // pred_check
          %p536 = pneg %p154
        $region58: #{tpu_custom_call.1} parent=35 // pred_check_branch
          %538 = sbr.rel (%p536) target = $region60
        $region59: #{tpu_custom_call.1} parent=35 // pred_region
          %s540 = ssub.s32 128, 128
          %541 = vsyncadd [#allocation5], %s540
          %s542 = smul.addr %s29, 128
          %s543 = scalar_lea.hbm %s4, %s542
          %s545 = sshll.u32 [#allocation9], 4
          %s546 = int_to_ptr.vmem [resolvable:$true] %s545
          %548 = dma.vmem_to_hbm [thread:$0]  %s546, 128, %s543, [#allocation5]
        $region60: #{tpu_custom_call.1} parent=35 // pred_fallthru
          _
        // Predicated region
        $region61: #{tpu_custom_call.1} parent=35 // pred_check
          %p549 = pneg %p182
        $region62: #{tpu_custom_call.1} parent=35 // pred_check_branch
          %551 = sbr.rel (%p549) target = $region64
        $region63: #{tpu_custom_call.1} parent=35 // pred_region
          %s552 = smul.u32 2, %s30
          %s554 = ssub.s32 256, 256
          %555 = vsyncadd %s532, %s554
          %s556 = smul.addr %s29, 4
          %s557 = sadd.s32 %s552, %s556
          %s558 = smul.addr %s557, 128
          %s559 = scalar_lea.hbm %s5, %s558
          %s561 = sshll.u32 %s535, 4
          %s562 = int_to_ptr.vmem [resolvable:$true] %s561
          %564 = dma.vmem_to_hbm [thread:$0]  %s562, 256, %s559, %s532
        $region64: #{tpu_custom_call.1} parent=35 // pred_fallthru
          _
        // Predicated region
        $region65: #{tpu_custom_call.1} parent=35 // pred_check
          %p565 = pneg %p154
        $region66: #{tpu_custom_call.1} parent=35 // pred_check_branch
          %567 = sbr.rel (%p565) target = $region68
        $region67: #{tpu_custom_call.1} parent=35 // pred_region
          %568 = dma.done [#allocation5], 128
        $region68: #{tpu_custom_call.1} parent=35 // pred_fallthru
          _
      $region36: #{tpu_custom_call.1} parent=5 // pred_fallthru
        _
      %p569 = scmp.le.s32.totalorder 2, %s20
      // Predicated region
      $region69: #{tpu_custom_call.1} parent=5 // pred_check
        %p570 = pneg %p569
      $region70: #{tpu_custom_call.1} parent=5 // pred_check_branch
        %572 = sbr.rel (%p570) target = $region72
      $region71: #{tpu_custom_call.1} parent=5 // pred_region
        %s573 = ssub.s32 %s20, 2
        // Predicated region
        $region73: #{tpu_custom_call.1} parent=71 // pred_check
          %p574 = pneg %p188
        $region74: #{tpu_custom_call.1} parent=71 // pred_check_branch
          %576 = sbr.rel (%p574) target = $region76
        $region75: #{tpu_custom_call.1} parent=71 // pred_region
          %s577 = sand.u32 %s173, 1
          %s578 = scalar_lea.sflag [#allocation11], %s577
          %s579 = sand.u32 %s173, 1
          %s580 = smul.addr %s579, 16
          %s581 = scalar_lea.vmem [#allocation10], %s580
          %582 = dma.done %s578, 256
        $region76: #{tpu_custom_call.1} parent=71 // pred_fallthru
          _
      $region72: #{tpu_custom_call.1} parent=5 // pred_fallthru
        _
    $region6: #{tpu_custom_call.1} parent=1 // loop_footer
      %s24 = sadd.s32 1, %s20
    $region7: #{tpu_custom_call.1} parent=1 // loop_footer_branch
      %19 = sbr.rel target = $region3
    $region8: #{tpu_custom_call.1} parent=1 // loop_exit
      _
    %583 = vsyncpa [#allocation4], 1
    %s584 = scalar_lea.sflag [#allocation4], 1
    %585 = vsyncpa %s584, 1
    %586 = vsyncpa [#allocation7], 1
    %s587 = scalar_lea.sflag [#allocation7], 1
    %588 = vsyncpa %s587, 1
    %589 = vsyncpa [#allocation5], 1
    %s590 = scalar_lea.sflag [#allocation5], 1
    %591 = vsyncpa %s590, 1
    %592 = vsyncpa [#allocation11], 1
    %s593 = scalar_lea.sflag [#allocation11], 1
    %594 = vsyncpa %s593, 1

</llo_original>
